<compile_context>
chip_gen: v7x
topology: tpu7x:2x2x1
jax: 0.10.0
libtpu: 0.0.40
codegen_flags: <defaults>
</compile_context>

<pallas_src>
import jax
import jax.numpy as jnp
from jax.experimental import pallas as pl
from jax.experimental.pallas import tpu as pltpu


def _round_up(x, m):
    return ((x + m - 1) // m) * m


def _mrnet_fused_kernel(x_ref, w1_ref, b1_ref, w2_ref, b2_ref, out_ref):
    """Fused MRNetArray forward for one batch row-block.

    x:   (Bt, D_in + npass)  f32 (cast to compute dtype in-kernel)
    w1:  (D_in + npass, H)   manifold folded into first layer, H = sum(hidden_k)
    b1:  (1, H)              f32
    w2:  (H, nout_total)     block-diagonal (no lane padding)
    b2:  (1, nout_total)     f32
    out: (Bt, nout_total)    f32
    """
    compute_dtype = w1_ref.dtype

    x = x_ref[...].astype(compute_dtype)  # in-kernel cast: VPU, hidden under DMA

    # First layer of all subnets (+ folded manifold reduction), f32 MXU accum.
    z = jnp.dot(x, w1_ref[...], preferred_element_type=jnp.float32) + b1_ref[...]
    z = jnp.tanh(z)  # f32 tanh on EUP (v5e-safe; separate bundle slot)

    # Fused second layer: one block-diagonal matmul + un-padded store.
    o = jnp.dot(z.astype(compute_dtype), w2_ref[...],
                preferred_element_type=jnp.float32) + b2_ref[...]
    out_ref[...] = o


def mrnet_prepare_params(manidef, manibiases, subnet_params, nouts,
                         *, compute_dtype=jnp.bfloat16):
    """One-time host-side weight fusion (call at model init, reuse per batch).

    manidef:    (D_in, nmv)  (== torch manifold.weight.T), manibiases: (nmv,)
    subnet_params: list of (w1 (nin, hidden_k), b1 (hidden_k,),
                            w2 (hidden_k, nout_k), b2 (nout_k,)) with nin = nmv+npass
    """
    D_in, nmv = manidef.shape
    nouts = tuple(int(n) for n in nouts)
    nout_total = int(sum(nouts))
    hiddens = [int(w1.shape[1]) for (w1, _, _, _) in subnet_params]
    H_total = int(sum(hiddens))
    nin_sub = int(subnet_params[0][0].shape[0])     # nmv + npass
    npass = nin_sub - nmv

    manidef = jnp.asarray(manidef, jnp.float32)
    manibiases = jnp.asarray(manibiases, jnp.float32)

    # Concatenate first layers of all subnets along the hidden (output) dim.
    w1m_cat = jnp.concatenate([jnp.asarray(w1, jnp.float32)[:nmv, :]
                               for (w1, _, _, _) in subnet_params], axis=1)   # (nmv, H)
    w1p_cat = jnp.concatenate([jnp.asarray(w1, jnp.float32)[nmv:, :]
                               for (w1, _, _, _) in subnet_params], axis=1)   # (npass, H)
    b1_cat = jnp.concatenate([jnp.asarray(b1, jnp.float32)
                              for (_, b1, _, _) in subnet_params], axis=0)    # (H,)

    # Fold the manifold Linear into the first layer (f32 on host).
    w1_eff = jnp.concatenate([manidef @ w1m_cat, w1p_cat], axis=0)  # (D_in+npass, H)
    b1_eff = manibiases @ w1m_cat + b1_cat                          # (H,)

    # Block-diagonal second layer, NO lane padding (un-padded store in kernel).
    w2_blk = jnp.zeros((H_total, nout_total), dtype=jnp.float32)
    b2_cat = jnp.zeros((nout_total,), dtype=jnp.float32)
    roff, coff = 0, 0
    for (_, _, w2, b2), h, n in zip(subnet_params, hiddens, nouts):
        w2_blk = w2_blk.at[roff:roff + h, coff:coff + n].set(jnp.asarray(w2, jnp.float32))
        b2_cat = b2_cat.at[coff:coff + n].set(jnp.asarray(b2, jnp.float32))
        roff += h
        coff += n

    return {
        "w1": w1_eff.astype(compute_dtype),               # (D_in+npass, H)
        "b1": b1_eff.reshape(1, -1).astype(jnp.float32),  # (1, H)
        "w2": w2_blk.astype(compute_dtype),               # (H, nout_total)
        "b2": b2_cat.reshape(1, -1).astype(jnp.float32),  # (1, nout_total)
        "nin_total": D_in + npass,
        "nout_total": nout_total,
    }


def mrnet_forward(x, params, *, batch_tile=1024):
    """Fused MRNetArray forward. x: (B, D_in + npass) f32."""
    B, nin_total = x.shape
    assert nin_total == params["nin_total"], (nin_total, params["nin_total"])
    nout_total = params["nout_total"]
    w1, b1, w2, b2 = params["w1"], params["b1"], params["w2"], params["b2"]

    # ---- batch tiling (single pass over x; pad rows only if needed) ----
    Bt = min(int(batch_tile), _round_up(B, 16))
    # v7x megacore: prefer >= 2 grid steps when the batch is large enough so the
    # "parallel" batch axis can be sharded across both TensorCores.
    if B <= Bt and B >= 32:
        Bt = max(16, _round_up(pl.cdiv(B, 2), 16))
    B_pad = _round_up(B, Bt)
    x_in = jnp.asarray(x, jnp.float32)
    if B_pad != B:
        x_in = jnp.pad(x_in, ((0, B_pad - B), (0, 0)))

    grid = (B_pad // Bt,)

    def _const(arr):  # weights/biases: full block, VMEM-resident across the grid
        return pl.BlockSpec(arr.shape, lambda i: (0, 0))

    out = pl.pallas_call(
        _mrnet_fused_kernel,
        out_shape=jax.ShapeDtypeStruct((B_pad, nout_total), jnp.float32),
        grid=grid,
        in_specs=[
            pl.BlockSpec((Bt, nin_total), lambda i: (i, 0)),   # x row block
            _const(w1), _const(b1), _const(w2), _const(b2),
        ],
        out_specs=pl.BlockSpec((Bt, nout_total), lambda i: (i, 0)),
        compiler_params=pltpu.CompilerParams(
            dimension_semantics=("parallel",),
            vmem_limit_bytes=32 * 1024 * 1024,  # budget against v7x's 64 MiB VMEM
        ),
    )(x_in, w1, b1, w2, b2)

    # Padded (garbage) rows trimmed; no column slice needed anymore.
    return out[:B] if B_pad != B else out


def mrnet_reference(x, manidef, manibiases, subnet_params, D_in):
    """Pure-JAX f32 reference mirroring the PyTorch forward."""
    m = x[:, :D_in] @ manidef + manibiases
    h = jnp.concatenate([m, x[:, D_in:]], axis=1)
    outs = []
    for (w1, b1, w2, b2) in subnet_params:
        z = jnp.tanh(h @ w1 + b1)
        outs.append(z @ w2 + b2)
    return jnp.concatenate(outs, axis=1)


if __name__ == "__main__":
    # Small, module-consistent shapes.
    B = 8          # batch
    D_in = 12      # full input species dim
    npass = 4      # passthrough variables
    nmv = 5        # manifold variables (nmv)
    hidden = 32    # subnet hidden width
    nouts = (2, 1, 3)   # per-subnet output counts -> total nout = 6
    nin = nmv + npass   # subnet input width

    key = jax.random.PRNGKey(0)
    keys = jax.random.split(key, 3 + 4 * len(nouts))

    x = jax.random.normal(keys[0], (B, D_in + npass), dtype=jnp.float32)
    # manidef is (D_in, nmv); torch manifold.weight = manidef.T, bias = manibiases.
    manidef = jax.random.normal(keys[1], (D_in, nmv), dtype=jnp.float32) * 0.3
    manibiases = jax.random.normal(keys[2], (nmv,), dtype=jnp.float32) * 0.1

    subnet_params = []
    kidx = 3
    for nout_k in nouts:
        w1 = jax.random.normal(keys[kidx + 0], (nin, hidden), dtype=jnp.float32) * 0.2
        b1 = jax.random.normal(keys[kidx + 1], (hidden,), dtype=jnp.float32) * 0.1
        w2 = jax.random.normal(keys[kidx + 2], (hidden, nout_k), dtype=jnp.float32) * 0.2
        b2 = jax.random.normal(keys[kidx + 3], (nout_k,), dtype=jnp.float32) * 0.1
        subnet_params.append((w1, b1, w2, b2))
        kidx += 4

    ref = mrnet_reference(x, manidef, manibiases, subnet_params, D_in)

    # 1) Exact-semantics check: f32 matmul operands.
    params_f32 = mrnet_prepare_params(manidef, manibiases, subnet_params, nouts,
                                      compute_dtype=jnp.float32)
    out_f32 = jax.block_until_ready(mrnet_forward(x, params_f32))
    assert out_f32.shape == (B, sum(nouts)), out_f32.shape
    assert jnp.allclose(out_f32, ref, atol=1e-4, rtol=1e-4), "f32 mismatch vs reference"

    # 2) Performance path: bf16 MXU operands, f32 accumulation / bias / tanh.
    params_bf16 = mrnet_prepare_params(manidef, manibiases, subnet_params, nouts,
                                       compute_dtype=jnp.bfloat16)
    out_bf16 = jax.block_until_ready(mrnet_forward(x, params_bf16))
    assert out_bf16.shape == (B, sum(nouts)), out_bf16.shape
    assert jnp.allclose(out_bf16, ref, atol=5e-2, rtol=5e-2), "bf16 mismatch vs reference"

    print("KERNEL_OK")
</pallas_src>

<mosaic_0001>
module attributes {stable_mosaic.version = 11 : i64} {
  func.func @_mrnet_fused_kernel(%arg0: i32, %arg1: memref<16x16xf32, #tpu.memory_space<vmem>>, %arg2: memref<16x96xf32, #tpu.memory_space<vmem>>, %arg3: memref<1x96xf32, #tpu.memory_space<vmem>>, %arg4: memref<96x6xf32, #tpu.memory_space<vmem>>, %arg5: memref<1x6xf32, #tpu.memory_space<vmem>>, %arg6: memref<16x6xf32, #tpu.memory_space<vmem>>) attributes {dimension_semantics = [#tpu.dimension_semantics<parallel>], iteration_bounds = array<i64: 1>, scalar_prefetch = 0 : i64, scratch_operands = 0 : i64, tpu.core_type = #tpu.core_type<tc>, window_params = [{transform_indices = @transform_0, window_bounds = array<i64: 16, 16>}, {pipeline_mode = #tpu.pipeline_mode<synchronous>, transform_indices = @transform_1, window_bounds = array<i64: 16, 96>}, {pipeline_mode = #tpu.pipeline_mode<synchronous>, transform_indices = @transform_2, window_bounds = array<i64: 1, 96>}, {pipeline_mode = #tpu.pipeline_mode<synchronous>, transform_indices = @transform_3, window_bounds = array<i64: 96, 6>}, {pipeline_mode = #tpu.pipeline_mode<synchronous>, transform_indices = @transform_4, window_bounds = array<i64: 1, 6>}, {transform_indices = @transform_5, window_bounds = array<i64: 16, 6>}]} {
    %c0 = arith.constant 0 : index
    %c0_0 = arith.constant 0 : index
    %0 = vector.load %arg1[%c0, %c0_0] : memref<16x16xf32, #tpu.memory_space<vmem>>, vector<16x16xf32>
    %c0_1 = arith.constant 0 : index
    %c0_2 = arith.constant 0 : index
    %1 = vector.load %arg2[%c0_1, %c0_2] : memref<16x96xf32, #tpu.memory_space<vmem>>, vector<16x96xf32>
    %cst = arith.constant dense<0.000000e+00> : vector<16x96xf32>
    %2 = tpu.matmul %0, %1, %cst {dimension_numbers = #tpu.dot_dimension_numbers<[1], [0], [0], [1], [0, 0, 1, 1], [], []>} : vector<16x16xf32>, vector<16x96xf32>, vector<16x96xf32> -> vector<16x96xf32>
    %c0_3 = arith.constant 0 : index
    %c0_4 = arith.constant 0 : index
    %3 = vector.load %arg3[%c0_3, %c0_4] : memref<1x96xf32, #tpu.memory_space<vmem>>, vector<1x96xf32>
    %4 = vector.broadcast %3 : vector<1x96xf32> to vector<16x96xf32>
    %5 = arith.addf %2, %4 : vector<16x96xf32>
    %6 = math.tanh %5 : vector<16x96xf32>
    %c0_5 = arith.constant 0 : index
    %c0_6 = arith.constant 0 : index
    %7 = vector.load %arg4[%c0_5, %c0_6] : memref<96x6xf32, #tpu.memory_space<vmem>>, vector<96x6xf32>
    %cst_7 = arith.constant dense<0.000000e+00> : vector<16x6xf32>
    %8 = tpu.matmul %6, %7, %cst_7 {dimension_numbers = #tpu.dot_dimension_numbers<[1], [0], [0], [1], [0, 0, 1, 1], [], []>} : vector<16x96xf32>, vector<96x6xf32>, vector<16x6xf32> -> vector<16x6xf32>
    %c0_8 = arith.constant 0 : index
    %c0_9 = arith.constant 0 : index
    %9 = vector.load %arg5[%c0_8, %c0_9] : memref<1x6xf32, #tpu.memory_space<vmem>>, vector<1x6xf32>
    %10 = vector.broadcast %9 : vector<1x6xf32> to vector<16x6xf32>
    %11 = arith.addf %8, %10 : vector<16x6xf32>
    %c0_10 = arith.constant 0 : index
    %c0_11 = arith.constant 0 : index
    %12 = vector.load %arg6[%c0_10, %c0_11] : memref<16x6xf32, #tpu.memory_space<vmem>>, vector<16x6xf32>
    tpu.vector_store %arg6[%c0_10, %c0_11], %11 {strides = array<i32>} : memref<16x6xf32, #tpu.memory_space<vmem>>, vector<16x6xf32>,
    return
  }
  func.func @transform_0(%arg0: i32) -> (i32, i32) {
    %c0_i32 = arith.constant 0 : i32
    %c0_i32_0 = arith.constant 0 : i32
    return %arg0, %c0_i32 : i32, i32
  }
  func.func @transform_1(%arg0: i32) -> (i32, i32) {
    %c0_i32 = arith.constant 0 : i32
    %c0_i32_0 = arith.constant 0 : i32
    %c0_i32_1 = arith.constant 0 : i32
    return %c0_i32, %c0_i32_0 : i32, i32
  }
  func.func @transform_2(%arg0: i32) -> (i32, i32) {
    %c0_i32 = arith.constant 0 : i32
    %c0_i32_0 = arith.constant 0 : i32
    %c0_i32_1 = arith.constant 0 : i32
    return %c0_i32, %c0_i32_0 : i32, i32
  }
  func.func @transform_3(%arg0: i32) -> (i32, i32) {
    %c0_i32 = arith.constant 0 : i32
    %c0_i32_0 = arith.constant 0 : i32
    %c0_i32_1 = arith.constant 0 : i32
    return %c0_i32, %c0_i32_0 : i32, i32
  }
  func.func @transform_4(%arg0: i32) -> (i32, i32) {
    %c0_i32 = arith.constant 0 : i32
    %c0_i32_0 = arith.constant 0 : i32
    %c0_i32_1 = arith.constant 0 : i32
    return %c0_i32, %c0_i32_0 : i32, i32
  }
  func.func @transform_5(%arg0: i32) -> (i32, i32) {
    %c0_i32 = arith.constant 0 : i32
    %c0_i32_0 = arith.constant 0 : i32
    return %arg0, %c0_i32 : i32, i32
  }
}

</mosaic_0001>

<llo_original>
// kernel: tpu_custom_call.1
$region0: #{tpu_custom_call.1}
  #allocation0 [shape = 'u32[]', space=smem, size = 0x4, offset = 0x4, fixed_abs, tag = 'smem constant byte address 0x4 - core index']
  #allocation1 [shape = 'u32[144,128]{1,0:T(1,128)}', space=vmem, size = 0x12000, scoped, tag = 'internal scratch']
  %s0 = inlined_call_operand.vmem [shape: f32[16,16], index: 0, kind: input, shape index: {}]
  %s1 = inlined_call_operand.vmem [shape: f32[16,96], index: 1, kind: input, shape index: {}]
  %s2 = inlined_call_operand.vmem [shape: f32[1,96], index: 2, kind: input, shape index: {}]
  %s3 = inlined_call_operand.vmem [shape: f32[96,6], index: 3, kind: input, shape index: {}]
  %s4 = inlined_call_operand.vmem [shape: f32[1,6], index: 4, kind: input, shape index: {}]
  %s5 = inlined_call_operand.vmem [shape: f32[16,6], index: 5, kind: output, shape index: {}]
  %s6 = sld [smem:[#allocation0]]
  $region30: #{tpu_custom_call.1} parent=0
    _
  %s8 = ssub.s32 1, %s6
  %s9 = scalar_select 0, %s8, %s6
  // Predicated region
  $region2: #{tpu_custom_call.1} parent=0 // pred_check
    _
  $region3: #{tpu_custom_call.1} parent=0 // pred_check_branch
    %11 = sbr.rel (0) target = $region5
  $region4: #{tpu_custom_call.1} parent=0 // pred_region
    _
  $region5: #{tpu_custom_call.1} parent=0 // pred_fallthru
    _
  // Predicated region
  $region6: #{tpu_custom_call.1} parent=0 // pred_check
    _
  $region7: #{tpu_custom_call.1} parent=0 // pred_check_branch
    %13 = sbr.rel (0) target = $region9
  $region8: #{tpu_custom_call.1} parent=0 // pred_region
    _
  $region9: #{tpu_custom_call.1} parent=0 // pred_fallthru
    _
  // Predicated region
  $region10: #{tpu_custom_call.1} parent=0 // pred_check
    _
  $region11: #{tpu_custom_call.1} parent=0 // pred_check_branch
    %15 = sbr.rel (0) target = $region13
  $region12: #{tpu_custom_call.1} parent=0 // pred_region
    _
  $region13: #{tpu_custom_call.1} parent=0 // pred_fallthru
    _
  // Predicated region
  $region14: #{tpu_custom_call.1} parent=0 // pred_check
    _
  $region15: #{tpu_custom_call.1} parent=0 // pred_check_branch
    %17 = sbr.rel (0) target = $region17
  $region16: #{tpu_custom_call.1} parent=0 // pred_region
    _
  $region17: #{tpu_custom_call.1} parent=0 // pred_fallthru
    _
  // Predicated region
  $region18: #{tpu_custom_call.1} parent=0 // pred_check
    _
  $region19: #{tpu_custom_call.1} parent=0 // pred_check_branch
    %19 = sbr.rel (0) target = $region21
  $region20: #{tpu_custom_call.1} parent=0 // pred_region
    _
  $region21: #{tpu_custom_call.1} parent=0 // pred_fallthru
    _
  %v20 = vld [vmem:[%s0] sm:$0xff]
  %v21 = vld [vmem:[%s0 + $0x8] sm:$0xff]
  %v22 = vld [vmem:[%s1] sm:$0xff]
  %v23 = vld [vmem:[%s1 + $0x8] sm:$0xff]
  %v24 = vld [vmem:[%s2] sm:$0x1]
  %v26 = vlaneseq
  %v27 = vshrl.u32 %v26, 7
  %v28 = vsub.s32 0, %v27
  %v29 = vrot.slane %v24, %v28
  %vm31 = vcmask 130048
  %v33 = vsel %vm31, %v20, 0
  %v36 = vsel %vm31, %v21, 0
  %38 = vmatprep.subr.mxu0 0.0
  %39 = vmatpush1.msra.mxu0 %v22
  %40 = vmatprep.subr.mxu0 0.0
  %41 = vmatpush1.msra.mxu0 %v23
  %42 = vmatprep.subr.mxu0 0.0
  %43 = vmatpush1.msra.mxu0 0.0
  %44 = vmatprep.subr.mxu0 0.0
  %45 = vmatpush1.msra.mxu0 0.0
  %46 = vmatprep.subr.mxu0 0.0
  %47 = vmatpush1.msra.mxu0 0.0
  %48 = vmatprep.subr.mxu0 0.0
  %49 = vmatpush1.msra.mxu0 0.0
  %50 = vmatprep.subr.mxu0 0.0
  %51 = vmatpush1.msra.mxu0 0.0
  %52 = vmatprep.subr.mxu0 0.0
  %53 = vmatpush1.msra.mxu0 0.0
  %54 = vmatprep.subr.mxu0 0.0
  %55 = vmatpush1.msra.mxu0 0.0
  %56 = vmatprep.subr.mxu0 0.0
  %57 = vmatpush1.msra.mxu0 0.0
  %58 = vmatprep.subr.mxu0 0.0
  %59 = vmatpush1.msra.mxu0 0.0
  %60 = vmatprep.subr.mxu0 0.0
  %61 = vmatpush1.msra.mxu0 0.0
  %62 = vmatprep.subr.mxu0 0.0
  %63 = vmatpush1.msra.mxu0 0.0
  %64 = vmatprep.subr.mxu0 0.0
  %65 = vmatpush1.msra.mxu0 0.0
  %66 = vmatprep.subr.mxu0 0.0
  %67 = vmatpush1.msra.mxu0 0.0
  %68 = vmatprep.subr.mxu0 0.0
  %69 = vmatpush1.msra.mxu0 0.0
  %70 = vmatprep.subr.mxu0 0.0
  %71 = vmatpush1.msra.mxu0 0.0
  %72 = vmatprep.subr.mxu0 0.0
  %73 = vmatpush1.msra.mxu0 0.0
  %74 = vmatprep.subr.mxu0 0.0
  %75 = vmatpush1.msra.mxu0 0.0
  %76 = vmatprep.subr.mxu0 0.0
  %77 = vmatpush1.msra.mxu0 0.0
  %78 = vmatprep.subr.mxu0 0.0
  %79 = vmatpush1.msra.mxu0 0.0
  %80 = vmatprep.subr.mxu0 0.0
  %81 = vmatpush1.msra.mxu0 0.0
  %82 = vmatprep.subr.mxu0 0.0
  %83 = vmatpush1.msra.mxu0 0.0
  %84 = vmatprep.subr.mxu0 0.0
  %85 = vmatpush1.msra.mxu0 0.0
  %86 = vmatprep.subr.mxu0 0.0
  %87 = vmatpush1.msra.mxu0 0.0
  %88 = vmatprep.subr.mxu0 0.0
  %89 = vmatpush1.msra.mxu0 0.0
  %90 = vmatprep.subr.mxu0 0.0
  %91 = vmatpush1.msra.mxu0 0.0
  %92 = vmatprep.subr.mxu0 0.0
  %93 = vmatpush1.msra.mxu0 0.0
  %94 = vmatprep.subr.mxu0 0.0
  %95 = vmatpush1.msra.mxu0 0.0
  %96 = vmatprep.subr.mxu0 0.0
  %97 = vmatpush1.msra.mxu0 0.0
  %98 = vmatprep.subr.mxu0 0.0
  %99 = vmatpush1.msra.mxu0 0.0
  %100 = vmatprep.subr.mxu0 0.0
  %101 = vmatpush1.msra.mxu0 0.0
  %102 = vmatprep.mubr.f32.mxu0 0.0
  %103 = vmatmul.mubr.f32.gmra.mrb[0].mxu0 %v33
  %v104 = vpop.f32.mrb[0].mxu0
  %v105 = vadd.f32 %v29, %v104
  %v106 = vpop.f32.mrb[0].mxu0
  %107 = vmatprep.mubr.f32.mxu0 0.0
  %108 = vmatmul.mubr.f32.gmra.mrb[0].mxu0 %v36
  %v109 = vpop.f32.mrb[0].mxu0
  %v110 = vadd.f32 %v29, %v109
  %v111 = vpop.f32.mrb[0].mxu0
  %112 = vdwg.mxu0
  %v113 = vtanh.pop %v105
  %v114 = vtanh.pop %v110
  %v115 = vld [vmem:[%s3] sm:$0xff]
  %v116 = vld [vmem:[%s3 + $0x8] sm:$0xff]
  %v117 = vld [vmem:[%s3 + $0x10] sm:$0xff]
  %v118 = vld [vmem:[%s3 + $0x18] sm:$0xff]
  %v119 = vld [vmem:[%s3 + $0x20] sm:$0xff]
  %v120 = vld [vmem:[%s3 + $0x28] sm:$0xff]
  %v121 = vld [vmem:[%s3 + $0x30] sm:$0xff]
  %v122 = vld [vmem:[%s3 + $0x38] sm:$0xff]
  %v123 = vld [vmem:[%s3 + $0x40] sm:$0xff]
  %v124 = vld [vmem:[%s3 + $0x48] sm:$0xff]
  %v125 = vld [vmem:[%s3 + $0x50] sm:$0xff]
  %v126 = vld [vmem:[%s3 + $0x58] sm:$0xff]
  %v127 = vld [vmem:[%s4] sm:$0x1]
  %v129 = vlaneseq
  %v130 = vshrl.u32 %v129, 7
  %v131 = vsub.s32 0, %v130
  %v132 = vrot.slane %v127, %v131
  %vm134 = vcmask 785408
  %v136 = vsel %vm134, %v113, 0
  %v139 = vsel %vm134, %v114, 0
  %141 = vmatprep.subr.mxu0 0.0
  %142 = vmatpush1.msra.mxu0 %v115
  %143 = vmatprep.subr.mxu0 0.0
  %144 = vmatpush1.msra.mxu0 %v116
  %145 = vmatprep.subr.mxu0 0.0
  %146 = vmatpush1.msra.mxu0 %v117
  %147 = vmatprep.subr.mxu0 0.0
  %148 = vmatpush1.msra.mxu0 %v118
  %149 = vmatprep.subr.mxu0 0.0
  %150 = vmatpush1.msra.mxu0 %v119
  %151 = vmatprep.subr.mxu0 0.0
  %152 = vmatpush1.msra.mxu0 %v120
  %153 = vmatprep.subr.mxu0 0.0
  %154 = vmatpush1.msra.mxu0 %v121
  %155 = vmatprep.subr.mxu0 0.0
  %156 = vmatpush1.msra.mxu0 %v122
  %157 = vmatprep.subr.mxu0 0.0
  %158 = vmatpush1.msra.mxu0 %v123
  %159 = vmatprep.subr.mxu0 0.0
  %160 = vmatpush1.msra.mxu0 %v124
  %161 = vmatprep.subr.mxu0 0.0
  %162 = vmatpush1.msra.mxu0 %v125
  %163 = vmatprep.subr.mxu0 0.0
  %164 = vmatpush1.msra.mxu0 %v126
  %165 = vmatprep.subr.mxu0 0.0
  %166 = vmatpush1.msra.mxu0 0.0
  %167 = vmatprep.subr.mxu0 0.0
  %168 = vmatpush1.msra.mxu0 0.0
  %169 = vmatprep.subr.mxu0 0.0
  %170 = vmatpush1.msra.mxu0 0.0
  %171 = vmatprep.subr.mxu0 0.0
  %172 = vmatpush1.msra.mxu0 0.0
  %173 = vmatprep.subr.mxu0 0.0
  %174 = vmatpush1.msra.mxu0 0.0
  %175 = vmatprep.subr.mxu0 0.0
  %176 = vmatpush1.msra.mxu0 0.0
  %177 = vmatprep.subr.mxu0 0.0
  %178 = vmatpush1.msra.mxu0 0.0
  %179 = vmatprep.subr.mxu0 0.0
  %180 = vmatpush1.msra.mxu0 0.0
  %181 = vmatprep.subr.mxu0 0.0
  %182 = vmatpush1.msra.mxu0 0.0
  %183 = vmatprep.subr.mxu0 0.0
  %184 = vmatpush1.msra.mxu0 0.0
  %185 = vmatprep.subr.mxu0 0.0
  %186 = vmatpush1.msra.mxu0 0.0
  %187 = vmatprep.subr.mxu0 0.0
  %188 = vmatpush1.msra.mxu0 0.0
  %189 = vmatprep.subr.mxu0 0.0
  %190 = vmatpush1.msra.mxu0 0.0
  %191 = vmatprep.subr.mxu0 0.0
  %192 = vmatpush1.msra.mxu0 0.0
  %193 = vmatprep.subr.mxu0 0.0
  %194 = vmatpush1.msra.mxu0 0.0
  %195 = vmatprep.subr.mxu0 0.0
  %196 = vmatpush1.msra.mxu0 0.0
  %197 = vmatprep.subr.mxu0 0.0
  %198 = vmatpush1.msra.mxu0 0.0
  %199 = vmatprep.subr.mxu0 0.0
  %200 = vmatpush1.msra.mxu0 0.0
  %201 = vmatprep.subr.mxu0 0.0
  %202 = vmatpush1.msra.mxu0 0.0
  %203 = vmatprep.subr.mxu0 0.0
  %204 = vmatpush1.msra.mxu0 0.0
  %205 = vmatprep.mubr.f32.mxu0 0.0
  %206 = vmatmul.mubr.f32.gmra.mrb[0].mxu0 %v136
  %v207 = vpop.f32.mrb[0].mxu0
  %v208 = vadd.f32 %v132, %v207
  %v209 = vpop.f32.mrb[0].mxu0
  %210 = vmatprep.mubr.f32.mxu0 0.0
  %211 = vmatmul.mubr.f32.gmra.mrb[0].mxu0 %v139
  %v212 = vpop.f32.mrb[0].mxu0
  %v213 = vadd.f32 %v132, %v212
  %v214 = vpop.f32.mrb[0].mxu0
  %215 = vdwg.mxu0
  %vm216 = vcmask 48128
  %217 = vst.msk [vmem:[%s5] sm:$0xff] %vm216, %v208
  %218 = vst.msk [vmem:[%s5 + $0x8] sm:$0xff] %vm216, %v213
  // Predicated region
  $region22: #{tpu_custom_call.1} parent=0 // pred_check
    _
  $region23: #{tpu_custom_call.1} parent=0 // pred_check_branch
    %220 = sbr.rel (0) target = $region25
  $region24: #{tpu_custom_call.1} parent=0 // pred_region
    _
  $region25: #{tpu_custom_call.1} parent=0 // pred_fallthru
    _
  // Predicated region
  $region26: #{tpu_custom_call.1} parent=0 // pred_check
    _
  $region27: #{tpu_custom_call.1} parent=0 // pred_check_branch
    %222 = sbr.rel (0) target = $region29
  $region28: #{tpu_custom_call.1} parent=0 // pred_region
    _
  $region29: #{tpu_custom_call.1} parent=0 // pred_fallthru
    _

</llo_original>
